<compile_context>
chip_gen: v7x
topology: tpu7x:2x2x1
jax: 0.10.0
libtpu: 0.0.40
codegen_flags: <defaults>
</compile_context>

<pallas_src>
import jax
import jax.numpy as jnp
from jax.experimental import pallas as pl
from jax.experimental.pallas import tpu as pltpu


# Single-buffered (x tile + y tile) byte budget per grid step.  The Pallas
# pipeline double-buffers, so peak tile VMEM is ~2x this — well inside v7x's
# 64 MiB physical VMEM and under the scoped limit we request explicitly.
_TILE_BUDGET_BYTES = 8 * 1024 * 1024
_MAX_BATCH_FOLD = 8  # cap on images folded per block (bounds kernel unroll)


def _make_outconv_kernel(bn):
    """Kernel for one (HW-tile, batch-block) grid point.

    x_ref : (Bn, Cin, T)   activations, NCHW flattened over H*W
    w_ref : (Cout, Cin)    1x1 conv weight (activation dtype)
    b_ref : (Cout, 1)      conv bias (float32, added to the f32 accumulator)
    o_ref : (Bn, Cout, T)  output tile (lane axis = T)
    """
    def kernel(x_ref, w_ref, b_ref, o_ref):
        w = w_ref[...]
        b = b_ref[...]
        for i in range(bn):  # static, small unroll (bn <= _MAX_BATCH_FOLD)
            y = jnp.dot(w, x_ref[i], preferred_element_type=jnp.float32)
            o_ref[i] = (y + b).astype(o_ref.dtype)
    return kernel


def _round_up(x, m):
    return (x + m - 1) // m * m


def _largest_lane_divisor(hw, cap):
    """Largest multiple of 128 dividing hw with value <= cap (hw % 128 == 0)."""
    best = 128
    for d in range(128, min(hw, cap) + 1, 128):
        if hw % d == 0:
            best = d
    return best


def _largest_divisor_leq(n, cap):
    for d in range(min(n, max(cap, 1)), 0, -1):
        if n % d == 0:
            return d
    return 1


@jax.jit
def out_conv(x_nchw, weight, bias):
    """OutConv forward. x: (N, Cin, H, W), weight: (Cout, Cin, 1, 1), bias: (Cout,)."""
    N, Cin, H, W = x_nchw.shape
    Cout = weight.shape[0]
    HW = H * W
    dtype = x_nchw.dtype
    itemsize = x_nchw.dtype.itemsize

    # Per-step element budget for Bn * T (covers both the x and y tiles).
    max_elems = max(_TILE_BUDGET_BYTES // ((Cin + Cout) * itemsize), 128)

    x = x_nchw.reshape(N, Cin, HW)
    needs_pad = False

    if HW <= max_elems:
        # Whole spatial extent in one block (block dim == full dim, so no 128
        # requirement and no padding); fold batch images to fatten each DMA.
        T = HW
        HWp = HW
        Bn = _largest_divisor_leq(N, min(_MAX_BATCH_FOLD, max_elems // max(T, 1)))
    elif HW % 128 == 0:
        # Largest lane-aligned tile that divides HW exactly -> no pad, no slice.
        T = _largest_lane_divisor(HW, max_elems)
        HWp = HW
        Bn = 1
    else:
        # Rare fallback: large, ragged HW.  Pad to a tile multiple, slice after.
        T = max(min((max_elems // 128) * 128, _round_up(HW, 128)), 128)
        HWp = _round_up(HW, T)
        x = jnp.pad(x, ((0, 0), (0, 0), (0, HWp - HW)))
        Bn = 1
        needs_pad = True

    w2d = weight.reshape(Cout, Cin).astype(dtype)      # keep bf16 weights bf16
    b2d = bias.reshape(Cout, 1).astype(jnp.float32)    # added to f32 accumulator

    g_hw = HWp // T
    g_n = N // Bn
    # Larger extent first so v7x's 2 TensorCores split the leading parallel
    # axis evenly (near-zero effect on single-TC v5e/v6e).
    if g_hw >= g_n:
        grid = (g_hw, g_n)
        io_map = lambda j, n: (n, 0, j)
    else:
        grid = (g_n, g_hw)
        io_map = lambda n, j: (n, 0, j)
    wb_map = lambda a, b: (0, 0)

    tile_bytes = Bn * (Cin + Cout) * T * itemsize
    vmem_limit = int(min(max(2 * tile_bytes + (4 << 20), 16 << 20), 48 << 20))

    flops = 2 * N * HWp * Cin * Cout
    bytes_accessed = (itemsize * (N * Cin * HWp + N * Cout * HWp)
                      + itemsize * Cout * Cin + 4 * Cout)

    y = pl.pallas_call(
        _make_outconv_kernel(Bn),
        out_shape=jax.ShapeDtypeStruct((N, Cout, HWp), dtype),
        grid_spec=pltpu.PrefetchScalarGridSpec(
            num_scalar_prefetch=0,
            grid=grid,
            in_specs=[
                pl.BlockSpec((Bn, Cin, T), io_map),
                pl.BlockSpec((Cout, Cin), wb_map),
                pl.BlockSpec((Cout, 1), wb_map),
            ],
            out_specs=pl.BlockSpec((Bn, Cout, T), io_map),
        ),
        compiler_params=pltpu.CompilerParams(
            dimension_semantics=("parallel", "parallel"),
            vmem_limit_bytes=vmem_limit),
        cost_estimate=pl.CostEstimate(flops=flops, transcendentals=0,
                                      bytes_accessed=bytes_accessed),
    )(x, w2d, b2d)

    if needs_pad:
        y = y[:, :, :HW]
    return y.reshape(N, Cout, H, W)


# ----------------------- pure-JAX reference for verification -----------------------
def ref_out_conv(x_nchw, weight, bias):
    y = jax.lax.conv_general_dilated(
        x_nchw, weight, window_strides=(1, 1), padding="VALID",
        dimension_numbers=("NCHW", "OIHW", "NCHW"))
    return y + bias[None, :, None, None]


if __name__ == "__main__":
    key = jax.random.PRNGKey(0)
    N, Cin, Cout, H, W = 2, 4, 8, 16, 16
    kx, kw, kb = jax.random.split(key, 3)
    x = jax.random.normal(kx, (N, Cin, H, W), jnp.float32)
    weight = 0.1 * jax.random.normal(kw, (Cout, Cin, 1, 1), jnp.float32)  # PyTorch OIHW
    bias = 0.1 * jax.random.normal(kb, (Cout,), jnp.float32)

    out = jax.block_until_ready(out_conv(x, weight, bias))
    ref = jax.block_until_ready(ref_out_conv(x, weight, bias))

    assert out.shape == (N, Cout, H, W), out.shape
    assert out.dtype == x.dtype, out.dtype
    max_err = float(jnp.max(jnp.abs(out - ref)))
    assert jnp.allclose(out, ref, atol=1e-5, rtol=1e-5), max_err
    print("KERNEL_OK")
</pallas_src>

<mosaic_0001>
module attributes {stable_mosaic.version = 11 : i64} {
  func.func @kernel(%arg0: i32, %arg1: i32, %arg2: memref<2x4x256xf32, #tpu.memory_space<vmem>>, %arg3: memref<8x4xf32, #tpu.memory_space<vmem>>, %arg4: memref<8x1xf32, #tpu.memory_space<vmem>>, %arg5: memref<2x8x256xf32, #tpu.memory_space<vmem>>) attributes {dimension_semantics = [#tpu.dimension_semantics<parallel>, #tpu.dimension_semantics<parallel>], iteration_bounds = array<i64: 1, 1>, scalar_prefetch = 0 : i64, scratch_operands = 0 : i64, tpu.core_type = #tpu.core_type<tc>, window_params = [{transform_indices = @transform_0, window_bounds = array<i64: 2, 4, 256>}, {pipeline_mode = #tpu.pipeline_mode<synchronous>, transform_indices = @transform_1, window_bounds = array<i64: 8, 4>}, {pipeline_mode = #tpu.pipeline_mode<synchronous>, transform_indices = @transform_2, window_bounds = array<i64: 8, 1>}, {transform_indices = @transform_3, window_bounds = array<i64: 2, 8, 256>}]} {
    %c0 = arith.constant 0 : index
    %c0_0 = arith.constant 0 : index
    %0 = vector.load %arg3[%c0, %c0_0] : memref<8x4xf32, #tpu.memory_space<vmem>>, vector<8x4xf32>
    %c0_1 = arith.constant 0 : index
    %c0_2 = arith.constant 0 : index
    %1 = vector.load %arg4[%c0_1, %c0_2] : memref<8x1xf32, #tpu.memory_space<vmem>>, vector<8x1xf32>
    %c0_3 = arith.constant 0 : index
    %c0_4 = arith.constant 0 : index
    %c0_5 = arith.constant 0 : index
    %2 = vector.load %arg2[%c0_3, %c0_4, %c0_5] : memref<2x4x256xf32, #tpu.memory_space<vmem>>, vector<1x4x256xf32>
    %3 = vector.shape_cast %2 : vector<1x4x256xf32> to vector<4x256xf32>
    %cst = arith.constant dense<0.000000e+00> : vector<8x256xf32>
    %4 = tpu.matmul %0, %3, %cst {dimension_numbers = #tpu.dot_dimension_numbers<[1], [0], [0], [1], [0, 0, 1, 1], [], []>} : vector<8x4xf32>, vector<4x256xf32>, vector<8x256xf32> -> vector<8x256xf32>
    %5 = vector.broadcast %1 : vector<8x1xf32> to vector<8x256xf32>
    %6 = arith.addf %4, %5 : vector<8x256xf32>
    %c0_6 = arith.constant 0 : index
    %c0_7 = arith.constant 0 : index
    %c0_8 = arith.constant 0 : index
    %7 = vector.load %arg5[%c0_6, %c0_7, %c0_8] : memref<2x8x256xf32, #tpu.memory_space<vmem>>, vector<1x8x256xf32>
    %8 = vector.shape_cast %7 : vector<1x8x256xf32> to vector<8x256xf32>
    %9 = vector.shape_cast %6 : vector<8x256xf32> to vector<1x8x256xf32>
    tpu.vector_store %arg5[%c0_6, %c0_7, %c0_8], %9 {strides = array<i32>} : memref<2x8x256xf32, #tpu.memory_space<vmem>>, vector<1x8x256xf32>,
    %c1 = arith.constant 1 : index
    %c0_9 = arith.constant 0 : index
    %c0_10 = arith.constant 0 : index
    %10 = vector.load %arg2[%c1, %c0_9, %c0_10] : memref<2x4x256xf32, #tpu.memory_space<vmem>>, vector<1x4x256xf32>
    %11 = vector.shape_cast %10 : vector<1x4x256xf32> to vector<4x256xf32>
    %cst_11 = arith.constant dense<0.000000e+00> : vector<8x256xf32>
    %12 = tpu.matmul %0, %11, %cst_11 {dimension_numbers = #tpu.dot_dimension_numbers<[1], [0], [0], [1], [0, 0, 1, 1], [], []>} : vector<8x4xf32>, vector<4x256xf32>, vector<8x256xf32> -> vector<8x256xf32>
    %13 = vector.broadcast %1 : vector<8x1xf32> to vector<8x256xf32>
    %14 = arith.addf %12, %13 : vector<8x256xf32>
    %c1_12 = arith.constant 1 : index
    %c0_13 = arith.constant 0 : index
    %c0_14 = arith.constant 0 : index
    %15 = vector.load %arg5[%c1_12, %c0_13, %c0_14] : memref<2x8x256xf32, #tpu.memory_space<vmem>>, vector<1x8x256xf32>
    %16 = vector.shape_cast %15 : vector<1x8x256xf32> to vector<8x256xf32>
    %17 = vector.shape_cast %14 : vector<8x256xf32> to vector<1x8x256xf32>
    tpu.vector_store %arg5[%c1_12, %c0_13, %c0_14], %17 {strides = array<i32>} : memref<2x8x256xf32, #tpu.memory_space<vmem>>, vector<1x8x256xf32>,
    return
  }
  func.func @transform_0(%arg0: i32, %arg1: i32) -> (i32, i32, i32) {
    %c0_i32 = arith.constant 0 : i32
    %c0_i32_0 = arith.constant 0 : i32
    return %arg1, %c0_i32, %arg0 : i32, i32, i32
  }
  func.func @transform_1(%arg0: i32, %arg1: i32) -> (i32, i32) {
    %c0_i32 = arith.constant 0 : i32
    %c0_i32_0 = arith.constant 0 : i32
    %c0_i32_1 = arith.constant 0 : i32
    return %c0_i32, %c0_i32_0 : i32, i32
  }
  func.func @transform_2(%arg0: i32, %arg1: i32) -> (i32, i32) {
    %c0_i32 = arith.constant 0 : i32
    %c0_i32_0 = arith.constant 0 : i32
    %c0_i32_1 = arith.constant 0 : i32
    return %c0_i32, %c0_i32_0 : i32, i32
  }
  func.func @transform_3(%arg0: i32, %arg1: i32) -> (i32, i32, i32) {
    %c0_i32 = arith.constant 0 : i32
    %c0_i32_0 = arith.constant 0 : i32
    return %arg1, %c0_i32, %arg0 : i32, i32, i32
  }
}

</mosaic_0001>

<llo_original>
// kernel: out_conv.1
$region0: #{out_conv.1}
  #allocation0 [shape = 'u32[]', space=smem, size = 0x4, offset = 0x4, fixed_abs, tag = 'smem constant byte address 0x4 - core index']
  #allocation1 [shape = 'u32[144,128]{1,0:T(1,128)}', space=vmem, size = 0x12000, scoped, tag = 'internal scratch']
  %s0 = inlined_call_operand.vmem [shape: f32[2,4,256], index: 0, kind: input, shape index: {}]
  %s1 = inlined_call_operand.vmem [shape: f32[8,4], index: 1, kind: input, shape index: {}]
  %s2 = inlined_call_operand.vmem [shape: f32[8,1], index: 2, kind: input, shape index: {}]
  %s3 = inlined_call_operand.vmem [shape: f32[2,8,256], index: 3, kind: output, shape index: {}]
  %s4 = sld [smem:[#allocation0]]
  $region22: #{out_conv.1} parent=0
    _
  %s6 = ssub.s32 1, %s4
  %s7 = scalar_select 0, %s6, %s4
  // Predicated region
  $region2: #{out_conv.1} parent=0 // pred_check
    _
  $region3: #{out_conv.1} parent=0 // pred_check_branch
    %9 = sbr.rel (0) target = $region5
  $region4: #{out_conv.1} parent=0 // pred_region
    _
  $region5: #{out_conv.1} parent=0 // pred_fallthru
    _
  // Predicated region
  $region6: #{out_conv.1} parent=0 // pred_check
    _
  $region7: #{out_conv.1} parent=0 // pred_check_branch
    %11 = sbr.rel (0) target = $region9
  $region8: #{out_conv.1} parent=0 // pred_region
    _
  $region9: #{out_conv.1} parent=0 // pred_fallthru
    _
  // Predicated region
  $region10: #{out_conv.1} parent=0 // pred_check
    _
  $region11: #{out_conv.1} parent=0 // pred_check_branch
    %13 = sbr.rel (0) target = $region13
  $region12: #{out_conv.1} parent=0 // pred_region
    _
  $region13: #{out_conv.1} parent=0 // pred_fallthru
    _
  %v14 = vld [vmem:[%s1] sm:$0xff]
  %v15 = vld [vmem:[%s2] sm:$0xff]
  %v16 = vld [vmem:[%s0] sm:$0xff]
  %18 = vset.pattern.permute.xlu0 0
  %19 = vperm.xlu0 %18, %v15
  %v20 = vpop.permute.xlu0 %19
  %v23 = vcombine.high %v16, %v16
  %vm24 = vcmask 31744
  %v26 = vsel %vm24, %v14, 0
  %vm28 = vcmask 1043456
  %v29 = vsel %vm28, %v16, 0
  %v31 = vsel %vm28, %v23, 0
  %33 = vmatprep.subr.mxu0 %v31
  %34 = vmatpush1.msra.mxu0 %v29
  %35 = vmatprep.subr.mxu0 0.0
  %36 = vmatpush1.msra.mxu0 0.0
  %37 = vmatprep.subr.mxu0 0.0
  %38 = vmatpush1.msra.mxu0 0.0
  %39 = vmatprep.subr.mxu0 0.0
  %40 = vmatpush1.msra.mxu0 0.0
  %41 = vmatprep.subr.mxu0 0.0
  %42 = vmatpush1.msra.mxu0 0.0
  %43 = vmatprep.subr.mxu0 0.0
  %44 = vmatpush1.msra.mxu0 0.0
  %45 = vmatprep.subr.mxu0 0.0
  %46 = vmatpush1.msra.mxu0 0.0
  %47 = vmatprep.subr.mxu0 0.0
  %48 = vmatpush1.msra.mxu0 0.0
  %49 = vmatprep.subr.mxu0 0.0
  %50 = vmatpush1.msra.mxu0 0.0
  %51 = vmatprep.subr.mxu0 0.0
  %52 = vmatpush1.msra.mxu0 0.0
  %53 = vmatprep.subr.mxu0 0.0
  %54 = vmatpush1.msra.mxu0 0.0
  %55 = vmatprep.subr.mxu0 0.0
  %56 = vmatpush1.msra.mxu0 0.0
  %57 = vmatprep.subr.mxu0 0.0
  %58 = vmatpush1.msra.mxu0 0.0
  %59 = vmatprep.subr.mxu0 0.0
  %60 = vmatpush1.msra.mxu0 0.0
  %61 = vmatprep.subr.mxu0 0.0
  %62 = vmatpush1.msra.mxu0 0.0
  %63 = vmatprep.subr.mxu0 0.0
  %64 = vmatpush1.msra.mxu0 0.0
  %65 = vmatprep.subr.mxu0 0.0
  %66 = vmatpush1.msra.mxu0 0.0
  %67 = vmatprep.subr.mxu0 0.0
  %68 = vmatpush1.msra.mxu0 0.0
  %69 = vmatprep.subr.mxu0 0.0
  %70 = vmatpush1.msra.mxu0 0.0
  %71 = vmatprep.subr.mxu0 0.0
  %72 = vmatpush1.msra.mxu0 0.0
  %73 = vmatprep.subr.mxu0 0.0
  %74 = vmatpush1.msra.mxu0 0.0
  %75 = vmatprep.subr.mxu0 0.0
  %76 = vmatpush1.msra.mxu0 0.0
  %77 = vmatprep.subr.mxu0 0.0
  %78 = vmatpush1.msra.mxu0 0.0
  %79 = vmatprep.subr.mxu0 0.0
  %80 = vmatpush1.msra.mxu0 0.0
  %81 = vmatprep.subr.mxu0 0.0
  %82 = vmatpush1.msra.mxu0 0.0
  %83 = vmatprep.subr.mxu0 0.0
  %84 = vmatpush1.msra.mxu0 0.0
  %85 = vmatprep.subr.mxu0 0.0
  %86 = vmatpush1.msra.mxu0 0.0
  %87 = vmatprep.subr.mxu0 0.0
  %88 = vmatpush1.msra.mxu0 0.0
  %89 = vmatprep.subr.mxu0 0.0
  %90 = vmatpush1.msra.mxu0 0.0
  %91 = vmatprep.subr.mxu0 0.0
  %92 = vmatpush1.msra.mxu0 0.0
  %93 = vmatprep.subr.mxu0 0.0
  %94 = vmatpush1.msra.mxu0 0.0
  %95 = vmatprep.subr.mxu0 0.0
  %96 = vmatpush1.msra.mxu0 0.0
  %97 = vmatprep.mubr.f32.mxu0 0.0
  %98 = vmatmul.mubr.f32.gmra.mrb[0].mxu0 %v26
  %v99 = vpop.f32.mrb[0].mxu0
  %v100 = vadd.f32 %v20, %v99
  %v101 = vpop.f32.mrb[0].mxu0
  %v102 = vadd.f32 %v20, %v101
  %103 = vdwg.mxu0
  %104 = vst [vmem:[%s3] sm:$0xff] %v100
  %105 = vst [vmem:[%s3 + $0x8] sm:$0xff] %v102
  %s106 = scalar_lea.vmem %s0, 8
  %v107 = vld [vmem:[%s106] sm:$0xff]
  %v109 = vcombine.high %v107, %v107
  %v110 = vsel %vm28, %v107, 0
  %v112 = vsel %vm28, %v109, 0
  %114 = vmatprep.subr.mxu0 %v112
  %115 = vmatpush1.msra.mxu0 %v110
  %116 = vmatprep.subr.mxu0 0.0
  %117 = vmatpush1.msra.mxu0 0.0
  %118 = vmatprep.subr.mxu0 0.0
  %119 = vmatpush1.msra.mxu0 0.0
  %120 = vmatprep.subr.mxu0 0.0
  %121 = vmatpush1.msra.mxu0 0.0
  %122 = vmatprep.subr.mxu0 0.0
  %123 = vmatpush1.msra.mxu0 0.0
  %124 = vmatprep.subr.mxu0 0.0
  %125 = vmatpush1.msra.mxu0 0.0
  %126 = vmatprep.subr.mxu0 0.0
  %127 = vmatpush1.msra.mxu0 0.0
  %128 = vmatprep.subr.mxu0 0.0
  %129 = vmatpush1.msra.mxu0 0.0
  %130 = vmatprep.subr.mxu0 0.0
  %131 = vmatpush1.msra.mxu0 0.0
  %132 = vmatprep.subr.mxu0 0.0
  %133 = vmatpush1.msra.mxu0 0.0
  %134 = vmatprep.subr.mxu0 0.0
  %135 = vmatpush1.msra.mxu0 0.0
  %136 = vmatprep.subr.mxu0 0.0
  %137 = vmatpush1.msra.mxu0 0.0
  %138 = vmatprep.subr.mxu0 0.0
  %139 = vmatpush1.msra.mxu0 0.0
  %140 = vmatprep.subr.mxu0 0.0
  %141 = vmatpush1.msra.mxu0 0.0
  %142 = vmatprep.subr.mxu0 0.0
  %143 = vmatpush1.msra.mxu0 0.0
  %144 = vmatprep.subr.mxu0 0.0
  %145 = vmatpush1.msra.mxu0 0.0
  %146 = vmatprep.subr.mxu0 0.0
  %147 = vmatpush1.msra.mxu0 0.0
  %148 = vmatprep.subr.mxu0 0.0
  %149 = vmatpush1.msra.mxu0 0.0
  %150 = vmatprep.subr.mxu0 0.0
  %151 = vmatpush1.msra.mxu0 0.0
  %152 = vmatprep.subr.mxu0 0.0
  %153 = vmatpush1.msra.mxu0 0.0
  %154 = vmatprep.subr.mxu0 0.0
  %155 = vmatpush1.msra.mxu0 0.0
  %156 = vmatprep.subr.mxu0 0.0
  %157 = vmatpush1.msra.mxu0 0.0
  %158 = vmatprep.subr.mxu0 0.0
  %159 = vmatpush1.msra.mxu0 0.0
  %160 = vmatprep.subr.mxu0 0.0
  %161 = vmatpush1.msra.mxu0 0.0
  %162 = vmatprep.subr.mxu0 0.0
  %163 = vmatpush1.msra.mxu0 0.0
  %164 = vmatprep.subr.mxu0 0.0
  %165 = vmatpush1.msra.mxu0 0.0
  %166 = vmatprep.subr.mxu0 0.0
  %167 = vmatpush1.msra.mxu0 0.0
  %168 = vmatprep.subr.mxu0 0.0
  %169 = vmatpush1.msra.mxu0 0.0
  %170 = vmatprep.subr.mxu0 0.0
  %171 = vmatpush1.msra.mxu0 0.0
  %172 = vmatprep.subr.mxu0 0.0
  %173 = vmatpush1.msra.mxu0 0.0
  %174 = vmatprep.subr.mxu0 0.0
  %175 = vmatpush1.msra.mxu0 0.0
  %176 = vmatprep.subr.mxu0 0.0
  %177 = vmatpush1.msra.mxu0 0.0
  %178 = vmatprep.mubr.f32.mxu0 0.0
  %179 = vmatmul.mubr.f32.gmra.mrb[0].mxu0 %v26
  %v180 = vpop.f32.mrb[0].mxu0
  %v181 = vadd.f32 %v20, %v180
  %v182 = vpop.f32.mrb[0].mxu0
  %v183 = vadd.f32 %v20, %v182
  %184 = vdwg.mxu0
  %s185 = scalar_lea.vmem %s3, 16
  %186 = vst [vmem:[%s185] sm:$0xff] %v181
  %187 = vst [vmem:[%s185 + $0x8] sm:$0xff] %v183
  // Predicated region
  $region14: #{out_conv.1} parent=0 // pred_check
    _
  $region15: #{out_conv.1} parent=0 // pred_check_branch
    %189 = sbr.rel (0) target = $region17
  $region16: #{out_conv.1} parent=0 // pred_region
    _
  $region17: #{out_conv.1} parent=0 // pred_fallthru
    _
  // Predicated region
  $region18: #{out_conv.1} parent=0 // pred_check
    _
  $region19: #{out_conv.1} parent=0 // pred_check_branch
    %191 = sbr.rel (0) target = $region21
  $region20: #{out_conv.1} parent=0 // pred_region
    _
  $region21: #{out_conv.1} parent=0 // pred_fallthru
    _

</llo_original>
